<compile_context>
chip_gen: v6e
topology: v6e:2x2x1
jax: 0.10.0
libtpu: 0.0.40
codegen_flags: <defaults>
</compile_context>

<pallas_src>
import jax
import jax.numpy as jnp
from jax.experimental import pallas as pl
from jax.experimental.pallas import tpu as pltpu


def _make_border_mask(H, W, dtype):
    """Validity mask per 3x3 tap over the flattened H*W axis (handles zero padding)."""
    hh = jnp.arange(H).reshape(H, 1)
    ww = jnp.arange(W).reshape(1, W)
    masks = []
    for dy in (-1, 0, 1):
        for dx in (-1, 0, 1):
            valid = ((hh + dy >= 0) & (hh + dy < H) &
                     (ww + dx >= 0) & (ww + dx < W))
            masks.append(valid.reshape(1, H * W))
    return jnp.stack(masks, axis=0).astype(dtype)  # (9, 1, H*W)


def mlp_block(x_nchw, conv3_weight, mlp_w1, bn_gamma, bn_beta, bn_mean, bn_var,
              mlp_w2, *, n_div, eps=1e-5, layer_scale=None,
              compute_dtype=jnp.float32):
    """FasterNet MLPBlock forward (eval mode).

    x_nchw:       (B, C, H, W)
    conv3_weight: (Cp, Cp, 3, 3) with Cp = C // n_div   (Partial_conv3 weight)
    mlp_w1:       (hidden, C, 1, 1) or (hidden, C)
    bn_*:         (hidden,)  BatchNorm2d(hidden) eval-mode affine/statistics
    mlp_w2:       (C, hidden, 1, 1) or (C, hidden)
    layer_scale:  optional (C,)  (forward_layer_scale path; None => plain forward)
    Returns (B, C, H, W) in x_nchw.dtype.
    """
    # TODO(synk): grouped 1x1 convs (groups > 1) not implemented; FasterNet uses groups=1.
    # act_layer assumed nn.ReLU (FasterNet default); DropPath is identity in eval mode.
    B, C, H, W = x_nchw.shape
    Cp = C // n_div
    HW = H * W
    hidden = mlp_w1.shape[0]
    has_rest = Cp < C
    out_dtype = x_nchw.dtype

    # ---- host-side constant prep (tiny tensors, computed once) ----
    scale = bn_gamma / jnp.sqrt(bn_var + eps)
    shift = bn_beta - bn_mean * scale
    w1 = mlp_w1.reshape(hidden, C) * scale[:, None]          # fold BN scale into W1 rows
    w1a = w1[:, :Cp].astype(compute_dtype)                   # columns hit by conv3-mixed channels
    w1b = w1[:, Cp:].astype(compute_dtype)                   # columns for untouched channels
    b1 = shift.reshape(hidden, 1).astype(jnp.float32)        # remaining BN shift
    w2 = mlp_w2.reshape(C, hidden)
    if layer_scale is not None:
        w2 = layer_scale[:, None] * w2                       # fold layer_scale into W2
    w2 = w2.astype(compute_dtype)
    # conv3 weight -> (tap, out, in), tap = (dy+1)*3 + (dx+1)
    w3 = jnp.transpose(conv3_weight, (2, 3, 0, 1)).reshape(9, Cp, Cp).astype(compute_dtype)
    mask = _make_border_mask(H, W, compute_dtype)            # (9, 1, HW)

    # Free reshape: NCHW with the spatial dims collapsed onto the lane axis.
    x = x_nchw.reshape(B, C, HW).astype(compute_dtype)

    def cdot(a, b):
        # (m, k) @ (k, n) -> (m, n) f32; avoid degenerate K==1 MXU matmuls.
        if a.shape[1] == 1:
            return a.astype(jnp.float32) * b.astype(jnp.float32)
        return jnp.dot(a, b, preferred_element_type=jnp.float32)

    def body(mask_ref, w3_ref, w1a_ref, w1b_ref, b1_ref, w2_ref, x_ref, o_ref):
        xi = x_ref[0]                                        # (C, HW)
        xc = xi[:Cp, :]                                      # channels fed to Partial_conv3
        # --- Partial_conv3: 3x3, pad=1, bias-free, on the first Cp channels ---
        acc = jnp.zeros((Cp, HW), jnp.float32)
        for t in range(9):
            dy, dx = t // 3 - 1, t % 3 - 1
            d = dy * W + dx
            s = xc if d == 0 else pltpu.roll(xc, (-d) % HW, axis=1)
            s = s * mask_ref[t]                              # zero the wrapped border taps
            acc = acc + cdot(w3_ref[t], s)
        acc = acc.astype(compute_dtype)
        # --- MLP: 1x1 conv (BN scale folded) -> +shift -> ReLU -> 1x1 conv ---
        h = cdot(w1a_ref[...], acc)
        if w1b_ref is not None:
            h = h + cdot(w1b_ref[...], xi[Cp:, :])
        h = jnp.maximum(h + b1_ref[...], 0.0).astype(compute_dtype)
        y = cdot(w2_ref[...], h)                             # (C, HW) f32
        # --- residual ---
        o_ref[0] = (xi.astype(jnp.float32) + y).astype(o_ref.dtype)

    if has_rest:
        kernel = body
    else:
        def kernel(mask_ref, w3_ref, w1a_ref, b1_ref, w2_ref, x_ref, o_ref):
            body(mask_ref, w3_ref, w1a_ref, None, b1_ref, w2_ref, x_ref, o_ref)

    in_specs = [
        pl.BlockSpec((9, 1, HW), lambda b: (0, 0, 0)),       # border mask (resident)
        pl.BlockSpec((9, Cp, Cp), lambda b: (0, 0, 0)),      # conv3 taps (resident)
        pl.BlockSpec((hidden, Cp), lambda b: (0, 0)),        # W1' conv-channel columns
    ]
    args = [mask, w3, w1a]
    if has_rest:
        in_specs.append(pl.BlockSpec((hidden, C - Cp), lambda b: (0, 0)))
        args.append(w1b)
    in_specs += [
        pl.BlockSpec((hidden, 1), lambda b: (0, 0)),         # BN shift
        pl.BlockSpec((C, hidden), lambda b: (0, 0)),         # W2 (+ optional layer_scale)
        pl.BlockSpec((1, C, HW), lambda b: (b, 0, 0)),       # one image per grid step
    ]
    args += [b1, w2, x]

    itemsize = jnp.dtype(compute_dtype).itemsize
    flops = 2 * B * HW * (9 * Cp * Cp + 2 * C * hidden)
    bytes_accessed = (B * C * HW * itemsize                              # x in
                      + B * C * HW * jnp.dtype(out_dtype).itemsize       # out
                      + (9 * Cp * Cp + hidden * C + C * hidden + 9 * HW) * itemsize
                      + hidden * 4)
    cost = pl.CostEstimate(flops=int(flops), transcendentals=0,
                           bytes_accessed=int(bytes_accessed))

    out = pl.pallas_call(
        kernel,
        out_shape=jax.ShapeDtypeStruct((B, C, HW), out_dtype),
        grid_spec=pltpu.PrefetchScalarGridSpec(
            num_scalar_prefetch=0,
            grid=(B,),
            in_specs=in_specs,
            out_specs=pl.BlockSpec((1, C, HW), lambda b: (b, 0, 0)),
        ),
        compiler_params=pltpu.CompilerParams(
            dimension_semantics=("parallel",)),
        cost_estimate=cost,
    )(*args)

    return out.reshape(B, C, H, W)


if __name__ == "__main__":
    # MLPBlock(dim=4, n_div=4, mlp_ratio=2.0, drop_path=0.0,
    #          layer_scale_init_value=0, act_layer=ReLU, norm_layer=BatchNorm2d,
    #          pconv_fw_type='split_cat', groups=1), eval mode.
    B, C, H, W = 2, 4, 16, 16
    n_div = 4
    mlp_ratio = 2.0
    hidden = int(C * mlp_ratio)   # 8
    Cp = C // n_div               # 1
    eps = 1e-5

    key = jax.random.PRNGKey(0)
    ks = jax.random.split(key, 8)
    x = jax.random.normal(ks[0], (B, C, H, W), dtype=jnp.float32)
    w3 = jax.random.normal(ks[1], (Cp, Cp, 3, 3), dtype=jnp.float32) * 0.2
    w1 = jax.random.normal(ks[2], (hidden, C, 1, 1), dtype=jnp.float32) * 0.2
    w2 = jax.random.normal(ks[3], (C, hidden, 1, 1), dtype=jnp.float32) * 0.2
    gamma = 1.0 + 0.1 * jax.random.normal(ks[4], (hidden,), dtype=jnp.float32)
    beta = 0.1 * jax.random.normal(ks[5], (hidden,), dtype=jnp.float32)
    mean = 0.1 * jax.random.normal(ks[6], (hidden,), dtype=jnp.float32)
    var = jax.random.uniform(ks[7], (hidden,), dtype=jnp.float32, minval=0.5, maxval=1.5)

    out = mlp_block(x, w3, w1, gamma, beta, mean, var, w2, n_div=n_div, eps=eps)
    out = jax.block_until_ready(out)

    # --- pure-JAX reference ---
    scale = gamma / jnp.sqrt(var + eps)
    shift = beta - mean * scale
    xc = x[:, :Cp]
    conv3 = jax.lax.conv_general_dilated(
        xc, w3, window_strides=(1, 1), padding=((1, 1), (1, 1)),
        dimension_numbers=('NCHW', 'OIHW', 'NCHW'),
        precision=jax.lax.Precision.HIGHEST)
    x_mix = jnp.concatenate([conv3, x[:, Cp:]], axis=1)
    h = jnp.einsum('oi,bihw->bohw', w1.reshape(hidden, C), x_mix,
                   precision=jax.lax.Precision.HIGHEST)
    h = jnp.maximum(h * scale[None, :, None, None] + shift[None, :, None, None], 0.0)
    y = jnp.einsum('oi,bihw->bohw', w2.reshape(C, hidden), h,
                   precision=jax.lax.Precision.HIGHEST)
    ref = x + y

    assert out.shape == (B, C, H, W), out.shape
    max_err = float(jnp.max(jnp.abs(out - ref)))
    assert jnp.allclose(out, ref, atol=1e-3, rtol=1e-3), max_err
    print("KERNEL_OK")
</pallas_src>

<mosaic_0001>
module attributes {stable_mosaic.version = 11 : i64} {
  func.func @body(%arg0: i32, %arg1: memref<9x1x256xf32, #tpu.memory_space<vmem>>, %arg2: memref<9x1x1xf32, #tpu.memory_space<vmem>>, %arg3: memref<8x1xf32, #tpu.memory_space<vmem>>, %arg4: memref<8x3xf32, #tpu.memory_space<vmem>>, %arg5: memref<8x1xf32, #tpu.memory_space<vmem>>, %arg6: memref<4x8xf32, #tpu.memory_space<vmem>>, %arg7: memref<1x4x256xf32, #tpu.memory_space<vmem>>, %arg8: memref<1x4x256xf32, #tpu.memory_space<vmem>>) attributes {dimension_semantics = [#tpu.dimension_semantics<parallel>], iteration_bounds = array<i64: 2>, scalar_prefetch = 0 : i64, scratch_operands = 0 : i64, tpu.core_type = #tpu.core_type<tc>, window_params = [{pipeline_mode = #tpu.pipeline_mode<synchronous>, transform_indices = @transform_0, window_bounds = array<i64: 9, 1, 256>}, {pipeline_mode = #tpu.pipeline_mode<synchronous>, transform_indices = @transform_1, window_bounds = array<i64: 9, 1, 1>}, {pipeline_mode = #tpu.pipeline_mode<synchronous>, transform_indices = @transform_2, window_bounds = array<i64: 8, 1>}, {pipeline_mode = #tpu.pipeline_mode<synchronous>, transform_indices = @transform_3, window_bounds = array<i64: 8, 3>}, {pipeline_mode = #tpu.pipeline_mode<synchronous>, transform_indices = @transform_4, window_bounds = array<i64: 8, 1>}, {pipeline_mode = #tpu.pipeline_mode<synchronous>, transform_indices = @transform_5, window_bounds = array<i64: 4, 8>}, {transform_indices = @transform_6, window_bounds = array<i64: 1, 4, 256>}, {transform_indices = @transform_7, window_bounds = array<i64: 1, 4, 256>}]} {
    %c0 = arith.constant 0 : index
    %c0_0 = arith.constant 0 : index
    %c0_1 = arith.constant 0 : index
    %0 = vector.load %arg7[%c0, %c0_0, %c0_1] : memref<1x4x256xf32, #tpu.memory_space<vmem>>, vector<1x4x256xf32>
    %1 = vector.shape_cast %0 : vector<1x4x256xf32> to vector<4x256xf32>
    %2 = vector.extract_strided_slice %1 {offsets = [0, 0], sizes = [1, 256], strides = [1, 1]} : vector<4x256xf32> to vector<1x256xf32>
    %cst = arith.constant 0.000000e+00 : f32
    %3 = vector.broadcast %cst : f32 to vector<1x256xf32>
    %c17_i32 = arith.constant 17 : i32
    %4 = tpu.dynamic_rotate %2 by %c17_i32 dim 1 : vector<1x256xf32>, i32 -> vector<1x256xf32>
    %c0_2 = arith.constant 0 : index
    %c0_3 = arith.constant 0 : index
    %c0_4 = arith.constant 0 : index
    %5 = vector.load %arg1[%c0_2, %c0_3, %c0_4] : memref<9x1x256xf32, #tpu.memory_space<vmem>>, vector<1x1x256xf32>
    %6 = vector.shape_cast %5 : vector<1x1x256xf32> to vector<1x256xf32>
    %7 = arith.mulf %4, %6 : vector<1x256xf32>
    %c0_5 = arith.constant 0 : index
    %c0_6 = arith.constant 0 : index
    %c0_7 = arith.constant 0 : index
    %8 = vector.load %arg2[%c0_5, %c0_6, %c0_7] : memref<9x1x1xf32, #tpu.memory_space<vmem>>, vector<1x1x1xf32>
    %9 = vector.shape_cast %8 : vector<1x1x1xf32> to vector<1x1xf32>
    %10 = vector.broadcast %9 : vector<1x1xf32> to vector<1x256xf32>
    %11 = arith.mulf %10, %7 : vector<1x256xf32>
    %12 = arith.addf %3, %11 : vector<1x256xf32>
    %c16_i32 = arith.constant 16 : i32
    %13 = tpu.dynamic_rotate %2 by %c16_i32 dim 1 : vector<1x256xf32>, i32 -> vector<1x256xf32>
    %c1 = arith.constant 1 : index
    %c0_8 = arith.constant 0 : index
    %c0_9 = arith.constant 0 : index
    %14 = vector.load %arg1[%c1, %c0_8, %c0_9] : memref<9x1x256xf32, #tpu.memory_space<vmem>>, vector<1x1x256xf32>
    %15 = vector.shape_cast %14 : vector<1x1x256xf32> to vector<1x256xf32>
    %16 = arith.mulf %13, %15 : vector<1x256xf32>
    %c1_10 = arith.constant 1 : index
    %c0_11 = arith.constant 0 : index
    %c0_12 = arith.constant 0 : index
    %17 = vector.load %arg2[%c1_10, %c0_11, %c0_12] : memref<9x1x1xf32, #tpu.memory_space<vmem>>, vector<1x1x1xf32>
    %18 = vector.shape_cast %17 : vector<1x1x1xf32> to vector<1x1xf32>
    %19 = vector.broadcast %18 : vector<1x1xf32> to vector<1x256xf32>
    %20 = arith.mulf %19, %16 : vector<1x256xf32>
    %21 = arith.addf %12, %20 : vector<1x256xf32>
    %c15_i32 = arith.constant 15 : i32
    %22 = tpu.dynamic_rotate %2 by %c15_i32 dim 1 : vector<1x256xf32>, i32 -> vector<1x256xf32>
    %c2 = arith.constant 2 : index
    %c0_13 = arith.constant 0 : index
    %c0_14 = arith.constant 0 : index
    %23 = vector.load %arg1[%c2, %c0_13, %c0_14] : memref<9x1x256xf32, #tpu.memory_space<vmem>>, vector<1x1x256xf32>
    %24 = vector.shape_cast %23 : vector<1x1x256xf32> to vector<1x256xf32>
    %25 = arith.mulf %22, %24 : vector<1x256xf32>
    %c2_15 = arith.constant 2 : index
    %c0_16 = arith.constant 0 : index
    %c0_17 = arith.constant 0 : index
    %26 = vector.load %arg2[%c2_15, %c0_16, %c0_17] : memref<9x1x1xf32, #tpu.memory_space<vmem>>, vector<1x1x1xf32>
    %27 = vector.shape_cast %26 : vector<1x1x1xf32> to vector<1x1xf32>
    %28 = vector.broadcast %27 : vector<1x1xf32> to vector<1x256xf32>
    %29 = arith.mulf %28, %25 : vector<1x256xf32>
    %30 = arith.addf %21, %29 : vector<1x256xf32>
    %c1_i32 = arith.constant 1 : i32
    %31 = tpu.dynamic_rotate %2 by %c1_i32 dim 1 : vector<1x256xf32>, i32 -> vector<1x256xf32>
    %c3 = arith.constant 3 : index
    %c0_18 = arith.constant 0 : index
    %c0_19 = arith.constant 0 : index
    %32 = vector.load %arg1[%c3, %c0_18, %c0_19] : memref<9x1x256xf32, #tpu.memory_space<vmem>>, vector<1x1x256xf32>
    %33 = vector.shape_cast %32 : vector<1x1x256xf32> to vector<1x256xf32>
    %34 = arith.mulf %31, %33 : vector<1x256xf32>
    %c3_20 = arith.constant 3 : index
    %c0_21 = arith.constant 0 : index
    %c0_22 = arith.constant 0 : index
    %35 = vector.load %arg2[%c3_20, %c0_21, %c0_22] : memref<9x1x1xf32, #tpu.memory_space<vmem>>, vector<1x1x1xf32>
    %36 = vector.shape_cast %35 : vector<1x1x1xf32> to vector<1x1xf32>
    %37 = vector.broadcast %36 : vector<1x1xf32> to vector<1x256xf32>
    %38 = arith.mulf %37, %34 : vector<1x256xf32>
    %39 = arith.addf %30, %38 : vector<1x256xf32>
    %c4 = arith.constant 4 : index
    %c0_23 = arith.constant 0 : index
    %c0_24 = arith.constant 0 : index
    %40 = vector.load %arg1[%c4, %c0_23, %c0_24] : memref<9x1x256xf32, #tpu.memory_space<vmem>>, vector<1x1x256xf32>
    %41 = vector.shape_cast %40 : vector<1x1x256xf32> to vector<1x256xf32>
    %42 = arith.mulf %2, %41 : vector<1x256xf32>
    %c4_25 = arith.constant 4 : index
    %c0_26 = arith.constant 0 : index
    %c0_27 = arith.constant 0 : index
    %43 = vector.load %arg2[%c4_25, %c0_26, %c0_27] : memref<9x1x1xf32, #tpu.memory_space<vmem>>, vector<1x1x1xf32>
    %44 = vector.shape_cast %43 : vector<1x1x1xf32> to vector<1x1xf32>
    %45 = vector.broadcast %44 : vector<1x1xf32> to vector<1x256xf32>
    %46 = arith.mulf %45, %42 : vector<1x256xf32>
    %47 = arith.addf %39, %46 : vector<1x256xf32>
    %c255_i32 = arith.constant 255 : i32
    %48 = tpu.dynamic_rotate %2 by %c255_i32 dim 1 : vector<1x256xf32>, i32 -> vector<1x256xf32>
    %c5 = arith.constant 5 : index
    %c0_28 = arith.constant 0 : index
    %c0_29 = arith.constant 0 : index
    %49 = vector.load %arg1[%c5, %c0_28, %c0_29] : memref<9x1x256xf32, #tpu.memory_space<vmem>>, vector<1x1x256xf32>
    %50 = vector.shape_cast %49 : vector<1x1x256xf32> to vector<1x256xf32>
    %51 = arith.mulf %48, %50 : vector<1x256xf32>
    %c5_30 = arith.constant 5 : index
    %c0_31 = arith.constant 0 : index
    %c0_32 = arith.constant 0 : index
    %52 = vector.load %arg2[%c5_30, %c0_31, %c0_32] : memref<9x1x1xf32, #tpu.memory_space<vmem>>, vector<1x1x1xf32>
    %53 = vector.shape_cast %52 : vector<1x1x1xf32> to vector<1x1xf32>
    %54 = vector.broadcast %53 : vector<1x1xf32> to vector<1x256xf32>
    %55 = arith.mulf %54, %51 : vector<1x256xf32>
    %56 = arith.addf %47, %55 : vector<1x256xf32>
    %c241_i32 = arith.constant 241 : i32
    %57 = tpu.dynamic_rotate %2 by %c241_i32 dim 1 : vector<1x256xf32>, i32 -> vector<1x256xf32>
    %c6 = arith.constant 6 : index
    %c0_33 = arith.constant 0 : index
    %c0_34 = arith.constant 0 : index
    %58 = vector.load %arg1[%c6, %c0_33, %c0_34] : memref<9x1x256xf32, #tpu.memory_space<vmem>>, vector<1x1x256xf32>
    %59 = vector.shape_cast %58 : vector<1x1x256xf32> to vector<1x256xf32>
    %60 = arith.mulf %57, %59 : vector<1x256xf32>
    %c6_35 = arith.constant 6 : index
    %c0_36 = arith.constant 0 : index
    %c0_37 = arith.constant 0 : index
    %61 = vector.load %arg2[%c6_35, %c0_36, %c0_37] : memref<9x1x1xf32, #tpu.memory_space<vmem>>, vector<1x1x1xf32>
    %62 = vector.shape_cast %61 : vector<1x1x1xf32> to vector<1x1xf32>
    %63 = vector.broadcast %62 : vector<1x1xf32> to vector<1x256xf32>
    %64 = arith.mulf %63, %60 : vector<1x256xf32>
    %65 = arith.addf %56, %64 : vector<1x256xf32>
    %c240_i32 = arith.constant 240 : i32
    %66 = tpu.dynamic_rotate %2 by %c240_i32 dim 1 : vector<1x256xf32>, i32 -> vector<1x256xf32>
    %c7 = arith.constant 7 : index
    %c0_38 = arith.constant 0 : index
    %c0_39 = arith.constant 0 : index
    %67 = vector.load %arg1[%c7, %c0_38, %c0_39] : memref<9x1x256xf32, #tpu.memory_space<vmem>>, vector<1x1x256xf32>
    %68 = vector.shape_cast %67 : vector<1x1x256xf32> to vector<1x256xf32>
    %69 = arith.mulf %66, %68 : vector<1x256xf32>
    %c7_40 = arith.constant 7 : index
    %c0_41 = arith.constant 0 : index
    %c0_42 = arith.constant 0 : index
    %70 = vector.load %arg2[%c7_40, %c0_41, %c0_42] : memref<9x1x1xf32, #tpu.memory_space<vmem>>, vector<1x1x1xf32>
    %71 = vector.shape_cast %70 : vector<1x1x1xf32> to vector<1x1xf32>
    %72 = vector.broadcast %71 : vector<1x1xf32> to vector<1x256xf32>
    %73 = arith.mulf %72, %69 : vector<1x256xf32>
    %74 = arith.addf %65, %73 : vector<1x256xf32>
    %c239_i32 = arith.constant 239 : i32
    %75 = tpu.dynamic_rotate %2 by %c239_i32 dim 1 : vector<1x256xf32>, i32 -> vector<1x256xf32>
    %c8 = arith.constant 8 : index
    %c0_43 = arith.constant 0 : index
    %c0_44 = arith.constant 0 : index
    %76 = vector.load %arg1[%c8, %c0_43, %c0_44] : memref<9x1x256xf32, #tpu.memory_space<vmem>>, vector<1x1x256xf32>
    %77 = vector.shape_cast %76 : vector<1x1x256xf32> to vector<1x256xf32>
    %78 = arith.mulf %75, %77 : vector<1x256xf32>
    %c8_45 = arith.constant 8 : index
    %c0_46 = arith.constant 0 : index
    %c0_47 = arith.constant 0 : index
    %79 = vector.load %arg2[%c8_45, %c0_46, %c0_47] : memref<9x1x1xf32, #tpu.memory_space<vmem>>, vector<1x1x1xf32>
    %80 = vector.shape_cast %79 : vector<1x1x1xf32> to vector<1x1xf32>
    %81 = vector.broadcast %80 : vector<1x1xf32> to vector<1x256xf32>
    %82 = arith.mulf %81, %78 : vector<1x256xf32>
    %83 = arith.addf %74, %82 : vector<1x256xf32>
    %c0_48 = arith.constant 0 : index
    %c0_49 = arith.constant 0 : index
    %84 = vector.load %arg3[%c0_48, %c0_49] : memref<8x1xf32, #tpu.memory_space<vmem>>, vector<8x1xf32>
    %85 = vector.broadcast %84 : vector<8x1xf32> to vector<8x256xf32>
    %86 = vector.broadcast %83 : vector<1x256xf32> to vector<8x256xf32>
    %87 = arith.mulf %85, %86 : vector<8x256xf32>
    %c0_50 = arith.constant 0 : index
    %c0_51 = arith.constant 0 : index
    %88 = vector.load %arg4[%c0_50, %c0_51] : memref<8x3xf32, #tpu.memory_space<vmem>>, vector<8x3xf32>
    %89 = vector.extract_strided_slice %1 {offsets = [1, 0], sizes = [3, 256], strides = [1, 1]} : vector<4x256xf32> to vector<3x256xf32>
    %cst_52 = arith.constant dense<0.000000e+00> : vector<8x256xf32>
    %90 = tpu.matmul %88, %89, %cst_52 {dimension_numbers = #tpu.dot_dimension_numbers<[1], [0], [0], [1], [0, 0, 1, 1], [], []>} : vector<8x3xf32>, vector<3x256xf32>, vector<8x256xf32> -> vector<8x256xf32>
    %91 = arith.addf %87, %90 : vector<8x256xf32>
    %c0_53 = arith.constant 0 : index
    %c0_54 = arith.constant 0 : index
    %92 = vector.load %arg5[%c0_53, %c0_54] : memref<8x1xf32, #tpu.memory_space<vmem>>, vector<8x1xf32>
    %93 = vector.broadcast %92 : vector<8x1xf32> to vector<8x256xf32>
    %94 = arith.addf %91, %93 : vector<8x256xf32>
    %cst_55 = arith.constant 0.000000e+00 : f32
    %95 = vector.broadcast %cst_55 : f32 to vector<8x256xf32>
    %96 = arith.maximumf %94, %95 : vector<8x256xf32>
    %c0_56 = arith.constant 0 : index
    %c0_57 = arith.constant 0 : index
    %97 = vector.load %arg6[%c0_56, %c0_57] : memref<4x8xf32, #tpu.memory_space<vmem>>, vector<4x8xf32>
    %cst_58 = arith.constant dense<0.000000e+00> : vector<4x256xf32>
    %98 = tpu.matmul %97, %96, %cst_58 {dimension_numbers = #tpu.dot_dimension_numbers<[1], [0], [0], [1], [0, 0, 1, 1], [], []>} : vector<4x8xf32>, vector<8x256xf32>, vector<4x256xf32> -> vector<4x256xf32>
    %99 = arith.addf %1, %98 : vector<4x256xf32>
    %c0_59 = arith.constant 0 : index
    %c0_60 = arith.constant 0 : index
    %c0_61 = arith.constant 0 : index
    %100 = vector.load %arg8[%c0_59, %c0_60, %c0_61] : memref<1x4x256xf32, #tpu.memory_space<vmem>>, vector<1x4x256xf32>
    %101 = vector.shape_cast %100 : vector<1x4x256xf32> to vector<4x256xf32>
    %102 = vector.shape_cast %99 : vector<4x256xf32> to vector<1x4x256xf32>
    tpu.vector_store %arg8[%c0_59, %c0_60, %c0_61], %102 {strides = array<i32>} : memref<1x4x256xf32, #tpu.memory_space<vmem>>, vector<1x4x256xf32>,
    return
  }
  func.func @transform_0(%arg0: i32) -> (i32, i32, i32) {
    %c0_i32 = arith.constant 0 : i32
    %c0_i32_0 = arith.constant 0 : i32
    %c0_i32_1 = arith.constant 0 : i32
    %c0_i32_2 = arith.constant 0 : i32
    return %c0_i32, %c0_i32_0, %c0_i32_1 : i32, i32, i32
  }
  func.func @transform_1(%arg0: i32) -> (i32, i32, i32) {
    %c0_i32 = arith.constant 0 : i32
    %c0_i32_0 = arith.constant 0 : i32
    %c0_i32_1 = arith.constant 0 : i32
    %c0_i32_2 = arith.constant 0 : i32
    return %c0_i32, %c0_i32_0, %c0_i32_1 : i32, i32, i32
  }
  func.func @transform_2(%arg0: i32) -> (i32, i32) {
    %c0_i32 = arith.constant 0 : i32
    %c0_i32_0 = arith.constant 0 : i32
    %c0_i32_1 = arith.constant 0 : i32
    return %c0_i32, %c0_i32_0 : i32, i32
  }
  func.func @transform_3(%arg0: i32) -> (i32, i32) {
    %c0_i32 = arith.constant 0 : i32
    %c0_i32_0 = arith.constant 0 : i32
    %c0_i32_1 = arith.constant 0 : i32
    return %c0_i32, %c0_i32_0 : i32, i32
  }
  func.func @transform_4(%arg0: i32) -> (i32, i32) {
    %c0_i32 = arith.constant 0 : i32
    %c0_i32_0 = arith.constant 0 : i32
    %c0_i32_1 = arith.constant 0 : i32
    return %c0_i32, %c0_i32_0 : i32, i32
  }
  func.func @transform_5(%arg0: i32) -> (i32, i32) {
    %c0_i32 = arith.constant 0 : i32
    %c0_i32_0 = arith.constant 0 : i32
    %c0_i32_1 = arith.constant 0 : i32
    return %c0_i32, %c0_i32_0 : i32, i32
  }
  func.func @transform_6(%arg0: i32) -> (i32, i32, i32) {
    %c0_i32 = arith.constant 0 : i32
    %c0_i32_0 = arith.constant 0 : i32
    %c0_i32_1 = arith.constant 0 : i32
    return %arg0, %c0_i32, %c0_i32_0 : i32, i32, i32
  }
  func.func @transform_7(%arg0: i32) -> (i32, i32, i32) {
    %c0_i32 = arith.constant 0 : i32
    %c0_i32_0 = arith.constant 0 : i32
    %c0_i32_1 = arith.constant 0 : i32
    return %arg0, %c0_i32, %c0_i32_0 : i32, i32, i32
  }
}

</mosaic_0001>

<llo_original>
// kernel: tpu_custom_call.1
$region0: #{tpu_custom_call.1}
  #allocation0 [shape = 'u32[]', space=smem, size = 0x4, offset = 0x4, fixed_abs, tag = 'smem constant byte address 0x4 - core index']
  #allocation1 [shape = 'u32[144,128]{1,0:T(1,128)}', space=vmem, size = 0x12000, scoped, tag = 'internal scratch']
  %s0 = inlined_call_operand.vmem [shape: f32[9,1,256], index: 0, kind: input, shape index: {}]
  %s1 = inlined_call_operand.vmem [shape: f32[9,1,1], index: 1, kind: input, shape index: {}]
  %s2 = inlined_call_operand.vmem [shape: f32[8,1], index: 2, kind: input, shape index: {}]
  %s3 = inlined_call_operand.vmem [shape: f32[8,3], index: 3, kind: input, shape index: {}]
  %s4 = inlined_call_operand.vmem [shape: f32[8,1], index: 4, kind: input, shape index: {}]
  %s5 = inlined_call_operand.vmem [shape: f32[4,8], index: 5, kind: input, shape index: {}]
  %s6 = inlined_call_operand.vmem [shape: f32[2,4,256], index: 6, kind: input, shape index: {}]
  %s7 = inlined_call_operand.hbm [shape: f32[2,4,256], index: 7, kind: output, shape index: {}]
  %s8 = sld [smem:[#allocation0]]
  $region61: #{tpu_custom_call.1} parent=0
    _
  %s10 = ssub.s32 1, %s8
  %s11 = scalar_select 0, %s10, %s8
  $region1: #{tpu_custom_call.1} parent=0
    #allocation2 [shape = 'u8[8192]{0}', space=vmem, size = 0x2000, scoped, tag = 'output window, operand 0']
    #allocation3 [shape = 's32[2]{0}', space=sflag, size = 0x8, scoped, tag = 'scoped memory for tpu_custom_call.1']
    %12 = vsyncpa [#allocation3], 0
    %s13 = scalar_lea.sflag [#allocation3], 1
    %14 = vsyncpa %s13, 0
    loop: start=0, step=1, limit=4
    $region2: #{tpu_custom_call.1} parent=1 // loop_pre_header
      _
    $region3: #{tpu_custom_call.1} parent=1 // loop_header
      %s16 = sphi 0, %s20
      %p17 = scmp.ge.s32.totalorder %s16, 4
      %s24 = sphi 0, %s24
      %s26 = sphi 0, %s24
      %s27 = sphi 0, %s26
      %s41 = sphi 0, %s27
      %s45 = sphi 0, %s45
      %s47 = sphi 0, %s45
      %s48 = sphi 0, %s47
      %s62 = sphi 0, %s48
      %s66 = sphi 0, %s66
      %s68 = sphi 0, %s66
      %s69 = sphi 0, %s68
      %s83 = sphi 0, %s69
      %s87 = sphi 0, %s87
      %s89 = sphi 0, %s87
      %s90 = sphi 0, %s89
      %s104 = sphi 0, %s90
      %s108 = sphi 0, %s108
      %s110 = sphi 0, %s108
      %s111 = sphi 0, %s110
      %s125 = sphi 0, %s111
      %s129 = sphi 0, %s129
      %s131 = sphi 0, %s129
      %s132 = sphi 0, %s131
      %s146 = sphi 0, %s132
      %s152 = sphi 0, %s154
      %s155 = sphi 0, %s152
      %s156 = sphi 0, %s155
      %s172 = sphi 0, %s156
      %s178 = sphi 0, %s180
      %s181 = sphi 0, %s178
      %s182 = sphi 0, %s181
      %s198 = sphi 0, %s182
    $region4: #{tpu_custom_call.1} parent=1 // loop_header_branch
      %19 = sbr.rel (%p17) target = $region8
    $region5: #{tpu_custom_call.1} parent=1 // loop_body
      %s21 = ssub.s32 %s16, 1
      %s22 = ssub.s32 %s16, 2
      %s23 = sadd.s32 %s16, 1
      %s25 = sadd.s32 %s24, 1
      %p28 = scmp.eq.s32.totalorder %s16, 1
      %p29 = scmp.ne.s32.totalorder %s24, %s26
      %p30 = scmp.eq.s32.totalorder %s16, 0
      %p31 = por %p29, %p30
      %p32 = scmp.ne.s32.totalorder %s24, %s26
      %p33 = scmp.eq.s32.totalorder %s21, 1
      %p34 = por %p32, %p33
      %p35 = scmp.ne.s32.totalorder %s26, %s27
      %p36 = scmp.eq.s32.totalorder %s21, 0
      %p37 = por %p35, %p36
      %p38 = scmp.ne.s32.totalorder %s26, %s27
      %p39 = scmp.eq.s32.totalorder %s22, 1
      %p40 = por %p38, %p39
      %p42 = scmp.ne.s32.totalorder %s27, %s41
      %p43 = scmp.eq.s32.totalorder %s22, 0
      %p44 = por %p42, %p43
      %s46 = sadd.s32 %s45, 1
      %p49 = scmp.eq.s32.totalorder %s16, 1
      %p50 = scmp.ne.s32.totalorder %s45, %s47
      %p51 = scmp.eq.s32.totalorder %s16, 0
      %p52 = por %p50, %p51
      %p53 = scmp.ne.s32.totalorder %s45, %s47
      %p54 = scmp.eq.s32.totalorder %s21, 1
      %p55 = por %p53, %p54
      %p56 = scmp.ne.s32.totalorder %s47, %s48
      %p57 = scmp.eq.s32.totalorder %s21, 0
      %p58 = por %p56, %p57
      %p59 = scmp.ne.s32.totalorder %s47, %s48
      %p60 = scmp.eq.s32.totalorder %s22, 1
      %p61 = por %p59, %p60
      %p63 = scmp.ne.s32.totalorder %s48, %s62
      %p64 = scmp.eq.s32.totalorder %s22, 0
      %p65 = por %p63, %p64
      %s67 = sadd.s32 %s66, 1
      %p70 = scmp.eq.s32.totalorder %s16, 1
      %p71 = scmp.ne.s32.totalorder %s66, %s68
      %p72 = scmp.eq.s32.totalorder %s16, 0
      %p73 = por %p71, %p72
      %p74 = scmp.ne.s32.totalorder %s66, %s68
      %p75 = scmp.eq.s32.totalorder %s21, 1
      %p76 = por %p74, %p75
      %p77 = scmp.ne.s32.totalorder %s68, %s69
      %p78 = scmp.eq.s32.totalorder %s21, 0
      %p79 = por %p77, %p78
      %p80 = scmp.ne.s32.totalorder %s68, %s69
      %p81 = scmp.eq.s32.totalorder %s22, 1
      %p82 = por %p80, %p81
      %p84 = scmp.ne.s32.totalorder %s69, %s83
      %p85 = scmp.eq.s32.totalorder %s22, 0
      %p86 = por %p84, %p85
      %s88 = sadd.s32 %s87, 1
      %p91 = scmp.eq.s32.totalorder %s16, 1
      %p92 = scmp.ne.s32.totalorder %s87, %s89
      %p93 = scmp.eq.s32.totalorder %s16, 0
      %p94 = por %p92, %p93
      %p95 = scmp.ne.s32.totalorder %s87, %s89
      %p96 = scmp.eq.s32.totalorder %s21, 1
      %p97 = por %p95, %p96
      %p98 = scmp.ne.s32.totalorder %s89, %s90
      %p99 = scmp.eq.s32.totalorder %s21, 0
      %p100 = por %p98, %p99
      %p101 = scmp.ne.s32.totalorder %s89, %s90
      %p102 = scmp.eq.s32.totalorder %s22, 1
      %p103 = por %p101, %p102
      %p105 = scmp.ne.s32.totalorder %s90, %s104
      %p106 = scmp.eq.s32.totalorder %s22, 0
      %p107 = por %p105, %p106
      %s109 = sadd.s32 %s108, 1
      %p112 = scmp.eq.s32.totalorder %s16, 1
      %p113 = scmp.ne.s32.totalorder %s108, %s110
      %p114 = scmp.eq.s32.totalorder %s16, 0
      %p115 = por %p113, %p114
      %p116 = scmp.ne.s32.totalorder %s108, %s110
      %p117 = scmp.eq.s32.totalorder %s21, 1
      %p118 = por %p116, %p117
      %p119 = scmp.ne.s32.totalorder %s110, %s111
      %p120 = scmp.eq.s32.totalorder %s21, 0
      %p121 = por %p119, %p120
      %p122 = scmp.ne.s32.totalorder %s110, %s111
      %p123 = scmp.eq.s32.totalorder %s22, 1
      %p124 = por %p122, %p123
      %p126 = scmp.ne.s32.totalorder %s111, %s125
      %p127 = scmp.eq.s32.totalorder %s22, 0
      %p128 = por %p126, %p127
      %s130 = sadd.s32 %s129, 1
      %p133 = scmp.eq.s32.totalorder %s16, 1
      %p134 = scmp.ne.s32.totalorder %s129, %s131
      %p135 = scmp.eq.s32.totalorder %s16, 0
      %p136 = por %p134, %p135
      %p137 = scmp.ne.s32.totalorder %s129, %s131
      %p138 = scmp.eq.s32.totalorder %s21, 1
      %p139 = por %p137, %p138
      %p140 = scmp.ne.s32.totalorder %s131, %s132
      %p141 = scmp.eq.s32.totalorder %s21, 0
      %p142 = por %p140, %p141
      %p143 = scmp.ne.s32.totalorder %s131, %s132
      %p144 = scmp.eq.s32.totalorder %s22, 1
      %p145 = por %p143, %p144
      %p147 = scmp.ne.s32.totalorder %s132, %s146
      %p148 = scmp.eq.s32.totalorder %s22, 0
      %p149 = por %p147, %p148
      %s150 = ssub.s32 %s16, %s23
      %p151 = scmp.eq.s32.totalorder %s150, 0
      %s153 = sadd.s32 %s152, 1
      %s154 = scalar_select %p151, %s152, %s153
      %p157 = pneg %p151
      %p158 = scmp.eq.s32.totalorder %s16, 1
      %p159 = por %p157, %p158
      %p160 = scmp.ne.s32.totalorder %s152, %s155
      %p161 = scmp.eq.s32.totalorder %s16, 0
      %p162 = por %p160, %p161
      %p163 = scmp.ne.s32.totalorder %s152, %s155
      %p164 = scmp.eq.s32.totalorder %s21, 1
      %p165 = por %p163, %p164
      %p166 = scmp.ne.s32.totalorder %s155, %s156
      %p167 = scmp.eq.s32.totalorder %s21, 0
      %p168 = por %p166, %p167
      %p169 = scmp.ne.s32.totalorder %s155, %s156
      %p170 = scmp.eq.s32.totalorder %s22, 1
      %p171 = por %p169, %p170
      %p173 = scmp.ne.s32.totalorder %s156, %s172
      %p174 = scmp.eq.s32.totalorder %s22, 0
      %p175 = por %p173, %p174
      %s176 = ssub.s32 %s16, %s23
      %p177 = scmp.eq.s32.totalorder %s176, 0
      %s179 = sadd.s32 %s178, 1
      %s180 = scalar_select %p177, %s178, %s179
      %p183 = pneg %p177
      %p184 = scmp.eq.s32.totalorder %s16, 1
      %p185 = por %p183, %p184
      %p186 = scmp.ne.s32.totalorder %s178, %s181
      %p187 = scmp.eq.s32.totalorder %s16, 0
      %p188 = por %p186, %p187
      %p189 = scmp.ne.s32.totalorder %s178, %s181
      %p190 = scmp.eq.s32.totalorder %s21, 1
      %p191 = por %p189, %p190
      %p192 = scmp.ne.s32.totalorder %s181, %s182
      %p193 = scmp.eq.s32.totalorder %s21, 0
      %p194 = por %p192, %p193
      %p195 = scmp.ne.s32.totalorder %s181, %s182
      %p196 = scmp.eq.s32.totalorder %s22, 1
      %p197 = por %p195, %p196
      %p199 = scmp.ne.s32.totalorder %s182, %s198
      %p200 = scmp.eq.s32.totalorder %s22, 0
      %p201 = por %p199, %p200
      %p202 = scmp.le.s32.totalorder 1, %s16
      %p203 = scmp.lt.s32.totalorder %s16, 3
      %p204 = pnand %p202, %p203
      %p205 = pneg %p204
      // Predicated region
      $region9: #{tpu_custom_call.1} parent=5 // pred_check
        _
      $region10: #{tpu_custom_call.1} parent=5 // pred_check_branch
        %207 = sbr.rel (%p204) target = $region12
      $region11: #{tpu_custom_call.1} parent=5 // pred_region
        %s208 = ssub.s32 %s16, 1
        // Predicated region
        $region13: #{tpu_custom_call.1} parent=11 // pred_check
          %p209 = pneg %p37
        $region14: #{tpu_custom_call.1} parent=11 // pred_check_branch
          %211 = sbr.rel (%p209) target = $region16
        $region15: #{tpu_custom_call.1} parent=11 // pred_region
          _
        $region16: #{tpu_custom_call.1} parent=11 // pred_fallthru
          _
        // Predicated region
        $region17: #{tpu_custom_call.1} parent=11 // pred_check
          %p212 = pneg %p58
        $region18: #{tpu_custom_call.1} parent=11 // pred_check_branch
          %214 = sbr.rel (%p212) target = $region20
        $region19: #{tpu_custom_call.1} parent=11 // pred_region
          _
        $region20: #{tpu_custom_call.1} parent=11 // pred_fallthru
          _
        // Predicated region
        $region21: #{tpu_custom_call.1} parent=11 // pred_check
          %p215 = pneg %p79
        $region22: #{tpu_custom_call.1} parent=11 // pred_check_branch
          %217 = sbr.rel (%p215) target = $region24
        $region23: #{tpu_custom_call.1} parent=11 // pred_region
          _
        $region24: #{tpu_custom_call.1} parent=11 // pred_fallthru
          _
        // Predicated region
        $region25: #{tpu_custom_call.1} parent=11 // pred_check
          %p218 = pneg %p100
        $region26: #{tpu_custom_call.1} parent=11 // pred_check_branch
          %220 = sbr.rel (%p218) target = $region28
        $region27: #{tpu_custom_call.1} parent=11 // pred_region
          _
        $region28: #{tpu_custom_call.1} parent=11 // pred_fallthru
          _
        // Predicated region
        $region29: #{tpu_custom_call.1} parent=11 // pred_check
          %p221 = pneg %p121
        $region30: #{tpu_custom_call.1} parent=11 // pred_check_branch
          %223 = sbr.rel (%p221) target = $region32
        $region31: #{tpu_custom_call.1} parent=11 // pred_region
          _
        $region32: #{tpu_custom_call.1} parent=11 // pred_fallthru
          _
        // Predicated region
        $region33: #{tpu_custom_call.1} parent=11 // pred_check
          %p224 = pneg %p142
        $region34: #{tpu_custom_call.1} parent=11 // pred_check_branch
          %226 = sbr.rel (%p224) target = $region36
        $region35: #{tpu_custom_call.1} parent=11 // pred_region
          _
        $region36: #{tpu_custom_call.1} parent=11 // pred_fallthru
          _
      $region12: #{tpu_custom_call.1} parent=5 // pred_fallthru
        _
      %p227 = scmp.lt.s32.totalorder %s16, 2
      // Predicated region
      $region37: #{tpu_custom_call.1} parent=5 // pred_check
        %p228 = pneg %p227
      $region38: #{tpu_custom_call.1} parent=5 // pred_check_branch
        %230 = sbr.rel (%p228) target = $region40
      $region39: #{tpu_custom_call.1} parent=5 // pred_region
        // Predicated region
        $region41: #{tpu_custom_call.1} parent=39 // pred_check
          %p231 = pneg %p162
        $region42: #{tpu_custom_call.1} parent=39 // pred_check_branch
          %233 = sbr.rel (%p231) target = $region44
        $region43: #{tpu_custom_call.1} parent=39 // pred_region
          %p234 = scmp.lt.s32.totalorder %s16, 1
          %s235 = scalar_select %p234, %s16, 1
          %s236 = smul.addr %s235, 2
          %s237 = smul.addr %s236, 4
          %s238 = scalar_lea.vmem %s6, %s237
        $region44: #{tpu_custom_call.1} parent=39 // pred_fallthru
          _
      $region40: #{tpu_custom_call.1} parent=5 // pred_fallthru
        _
      %p239 = scmp.le.s32.totalorder 1, %s16
      %p240 = scmp.lt.s32.totalorder %s16, 3
      %p241 = pnand %p239, %p240
      %p242 = pneg %p241
      // Predicated region
      $region45: #{tpu_custom_call.1} parent=5 // pred_check
        _
      $region46: #{tpu_custom_call.1} parent=5 // pred_check_branch
        %244 = sbr.rel (%p241) target = $region48
      $region47: #{tpu_custom_call.1} parent=5 // pred_region
        %s245 = ssub.s32 %s16, 1
        %p246 = pneg %p37
        %p247 = pneg %p34
        %p248 = pneg %p58
        %p249 = pneg %p55
        %p250 = pneg %p79
        %p251 = pneg %p76
        %p252 = pneg %p100
        %p253 = pneg %p97
        %p254 = pneg %p121
        %p255 = pneg %p118
        %p256 = pneg %p142
        %p257 = pneg %p139
        %p258 = scmp.lt.s32.totalorder %s21, 1
        %s259 = scalar_select %p258, %s21, 1
        %s260 = smul.addr %s259, 2
        %s261 = smul.addr %s260, 4
        %s262 = scalar_lea.vmem %s6, %s261
        %p263 = pneg %p168
        %p264 = pneg %p165
        %p265 = pneg %p194
        %p266 = pneg %p191
        %s267 = sand.u32 %s181, 1
        %s268 = scalar_lea.sflag [#allocation3], %s267
        %s269 = sand.u32 %s181, 1
        %s270 = smul.addr %s269, 8
        %s271 = scalar_lea.vmem [#allocation2], %s270
        %p272 = scmp.lt.s32.totalorder %s21, 1
        %s273 = scalar_select %p272, %s21, 1
        %s274 = smul.addr %s273, 2
        %s275 = smul.addr %s274, 4
        %s276 = scalar_lea.vmem %s6, %s275
        %v277 = vld [vmem:[%s276] sm:$0xff]
        %v279 = vlaneseq
        %v280 = vshrl.u32 %v279, 7
        %v281 = vsub.s32 0, %v280
        %v282 = vrot.slane %v277, %v281
        %v283 = vlaneseq
        %v284 = vshrl.u32 %v283, 7
        %v285 = vsub.s32 4, %v284
        %v286 = vrot.slane %v277, %v285
        %289 = vrot.lane.b32.xlu0 %v282, 17
        %v290 = vpop.permute.xlu0 %289
        %291 = vrot.lane.b32.xlu0 %v286, 17
        %v292 = vpop.permute.xlu0 %291
        %v293 = vlaneseq
        %v294 = vand.u32 %v293, 127
        %vm295 = vcmp.lt.s32.totalorder %v294, 17
        %v296 = vsel %vm295, %v290, %v292
        %v297 = vsel %vm295, %v292, %v290
        %v298 = vld [vmem:[%s0] sm:$0x3]
        %v300 = vlaneseq
        %v301 = vshrl.u32 %v300, 7
        %v302 = vsub.s32 0, %v301
        %v303 = vrot.slane %v298, %v302
        %v304 = vlaneseq
        %v305 = vshrl.u32 %v304, 7
        %v306 = vsub.s32 1, %v305
        %v307 = vrot.slane %v298, %v306
        %v310 = vmul.f32 %v297, %v303
        %v311 = vmul.f32 %v296, %v307
        %v312 = vld [vmem:[%s1] sm:$0x1]
        %314 = vset.pattern.permute.xlu0 0
        %315 = vperm.xlu0 %314, %v312
        %v316 = vpop.permute.xlu0 %315
        %v318 = vlaneseq
        %v319 = vshrl.u32 %v318, 7
        %v320 = vsub.s32 0, %v319
        %v321 = vrot.slane %v316, %v320
        %v322 = vmul.f32 %v321, %v310
        %v323 = vmul.f32 %v321, %v311
        %v324 = vadd.f32 %v322, 0.0
        %v325 = vadd.f32 %v323, 0.0
        %326 = vrot.lane.b32.xlu0 %v282, 16
        %v327 = vpop.permute.xlu0 %326
        %328 = vrot.lane.b32.xlu0 %v286, 16
        %v329 = vpop.permute.xlu0 %328
        %vm330 = vcmp.lt.s32.totalorder %v294, 16
        %v331 = vsel %vm330, %v327, %v329
        %v332 = vsel %vm330, %v329, %v327
        %s333 = scalar_lea.vmem %s0, 2
        %v334 = vld [vmem:[%s333] sm:$0x3]
        %v336 = vlaneseq
        %v337 = vshrl.u32 %v336, 7
        %v338 = vsub.s32 0, %v337
        %v339 = vrot.slane %v334, %v338
        %v340 = vlaneseq
        %v341 = vshrl.u32 %v340, 7
        %v342 = vsub.s32 1, %v341
        %v343 = vrot.slane %v334, %v342
        %v346 = vmul.f32 %v332, %v339
        %v347 = vmul.f32 %v331, %v343
        %s348 = scalar_lea.vmem %s1, 1
        %v349 = vld [vmem:[%s348] sm:$0x1]
        %351 = vset.pattern.permute.xlu0 0
        %352 = vperm.xlu0 %351, %v349
        %v353 = vpop.permute.xlu0 %352
        %v355 = vlaneseq
        %v356 = vshrl.u32 %v355, 7
        %v357 = vsub.s32 0, %v356
        %v358 = vrot.slane %v353, %v357
        %v359 = vmul.f32 %v358, %v346
        %v360 = vmul.f32 %v358, %v347
        %v361 = vadd.f32 %v324, %v359
        %v362 = vadd.f32 %v325, %v360
        %363 = vrot.lane.b32.xlu0 %v282, 15
        %v364 = vpop.permute.xlu0 %363
        %365 = vrot.lane.b32.xlu0 %v286, 15
        %v366 = vpop.permute.xlu0 %365
        %vm367 = vcmp.lt.s32.totalorder %v294, 15
        %v368 = vsel %vm367, %v364, %v366
        %v369 = vsel %vm367, %v366, %v364
        %s370 = scalar_lea.vmem %s0, 4
        %v371 = vld [vmem:[%s370] sm:$0x3]
        %v373 = vlaneseq
        %v374 = vshrl.u32 %v373, 7
        %v375 = vsub.s32 0, %v374
        %v376 = vrot.slane %v371, %v375
        %v377 = vlaneseq
        %v378 = vshrl.u32 %v377, 7
        %v379 = vsub.s32 1, %v378
        %v380 = vrot.slane %v371, %v379
        %v383 = vmul.f32 %v369, %v376
        %v384 = vmul.f32 %v368, %v380
        %s385 = scalar_lea.vmem %s1, 2
        %v386 = vld [vmem:[%s385] sm:$0x1]
        %388 = vset.pattern.permute.xlu0 0
        %389 = vperm.xlu0 %388, %v386
        %v390 = vpop.permute.xlu0 %389
        %v392 = vlaneseq
        %v393 = vshrl.u32 %v392, 7
        %v394 = vsub.s32 0, %v393
        %v395 = vrot.slane %v390, %v394
        %v396 = vmul.f32 %v395, %v383
        %v397 = vmul.f32 %v395, %v384
        %v398 = vadd.f32 %v361, %v396
        %v399 = vadd.f32 %v362, %v397
        %400 = vrot.lane.b32.xlu0 %v282, 1
        %v401 = vpop.permute.xlu0 %400
        %402 = vrot.lane.b32.xlu0 %v286, 1
        %v403 = vpop.permute.xlu0 %402
        %vm404 = vcmp.lt.s32.totalorder %v294, 1
        %v405 = vsel %vm404, %v401, %v403
        %v406 = vsel %vm404, %v403, %v401
        %s407 = scalar_lea.vmem %s0, 6
        %v408 = vld [vmem:[%s407] sm:$0x3]
        %v410 = vlaneseq
        %v411 = vshrl.u32 %v410, 7
        %v412 = vsub.s32 0, %v411
        %v413 = vrot.slane %v408, %v412
        %v414 = vlaneseq
        %v415 = vshrl.u32 %v414, 7
        %v416 = vsub.s32 1, %v415
        %v417 = vrot.slane %v408, %v416
        %v420 = vmul.f32 %v406, %v413
        %v421 = vmul.f32 %v405, %v417
        %s422 = scalar_lea.vmem %s1, 3
        %v423 = vld [vmem:[%s422] sm:$0x1]
        %425 = vset.pattern.permute.xlu0 0
        %426 = vperm.xlu0 %425, %v423
        %v427 = vpop.permute.xlu0 %426
        %v429 = vlaneseq
        %v430 = vshrl.u32 %v429, 7
        %v431 = vsub.s32 0, %v430
        %v432 = vrot.slane %v427, %v431
        %v433 = vmul.f32 %v432, %v420
        %v434 = vmul.f32 %v432, %v421
        %v435 = vadd.f32 %v398, %v433
        %v436 = vadd.f32 %v399, %v434
        %s437 = scalar_lea.vmem %s0, 8
        %v438 = vld [vmem:[%s437] sm:$0x3]
        %v441 = vunpack.c.l.s4 286326784
        %v442 = vunpack.c.0.s8 %v441
        %v443 = vlaneseq
        %v444 = vshrl.u32 %v443, 7
        %v445 = vsub.s32 %v442, %v444
        %v446 = vrot.slane %v438, %v445
        %v448 = vmul.f32 %v277, %v446
        %s449 = scalar_lea.vmem %s1, 4
        %v450 = vld [vmem:[%s449] sm:$0x1]
        %452 = vset.pattern.permute.xlu0 0
        %453 = vperm.xlu0 %452, %v450
        %v454 = vpop.permute.xlu0 %453
        %v456 = vlaneseq
        %v457 = vshrl.u32 %v456, 7
        %v458 = vsub.s32 0, %v457
        %v459 = vrot.slane %v454, %v458
        %v460 = vmul.f32 %v459, %v448
        %v462 = vlaneseq
        %v463 = vshrl.u32 %v462, 7
        %v464 = vsub.s32 0, %v463
        %v465 = vrot.slane %v460, %v464
        %v466 = vlaneseq
        %v467 = vshrl.u32 %v466, 7
        %v468 = vsub.s32 4, %v467
        %v469 = vrot.slane %v460, %v468
        %v472 = vadd.f32 %v435, %v465
        %v473 = vadd.f32 %v436, %v469
        %474 = vrot.lane.b32.xlu0 %v282, 127
        %v475 = vpop.permute.xlu0 %474
        %476 = vrot.lane.b32.xlu0 %v286, 127
        %v477 = vpop.permute.xlu0 %476
        %vm478 = vcmp.lt.s32.totalorder %v294, 127
        %v479 = vsel %vm478, %v475, %v477
        %v480 = vsel %vm478, %v477, %v475
        %s481 = scalar_lea.vmem %s0, 10
        %v482 = vld [vmem:[%s481] sm:$0x3]
        %v484 = vlaneseq
        %v485 = vshrl.u32 %v484, 7
        %v486 = vsub.s32 0, %v485
        %v487 = vrot.slane %v482, %v486
        %v488 = vlaneseq
        %v489 = vshrl.u32 %v488, 7
        %v490 = vsub.s32 1, %v489
        %v491 = vrot.slane %v482, %v490
        %v494 = vmul.f32 %v479, %v487
        %v495 = vmul.f32 %v480, %v491
        %s496 = scalar_lea.vmem %s1, 5
        %v497 = vld [vmem:[%s496] sm:$0x1]
        %499 = vset.pattern.permute.xlu0 0
        %500 = vperm.xlu0 %499, %v497
        %v501 = vpop.permute.xlu0 %500
        %v503 = vlaneseq
        %v504 = vshrl.u32 %v503, 7
        %v505 = vsub.s32 0, %v504
        %v506 = vrot.slane %v501, %v505
        %v507 = vmul.f32 %v506, %v494
        %v508 = vmul.f32 %v506, %v495
        %v509 = vadd.f32 %v472, %v507
        %v510 = vadd.f32 %v473, %v508
        %511 = vrot.lane.b32.xlu0 %v282, 113
        %v512 = vpop.permute.xlu0 %511
        %513 = vrot.lane.b32.xlu0 %v286, 113
        %v514 = vpop.permute.xlu0 %513
        %vm515 = vcmp.lt.s32.totalorder %v294, 113
        %v516 = vsel %vm515, %v512, %v514
        %v517 = vsel %vm515, %v514, %v512
        %s518 = scalar_lea.vmem %s0, 12
        %v519 = vld [vmem:[%s518] sm:$0x3]
        %v521 = vlaneseq
        %v522 = vshrl.u32 %v521, 7
        %v523 = vsub.s32 0, %v522
        %v524 = vrot.slane %v519, %v523
        %v525 = vlaneseq
        %v526 = vshrl.u32 %v525, 7
        %v527 = vsub.s32 1, %v526
        %v528 = vrot.slane %v519, %v527
        %v531 = vmul.f32 %v516, %v524
        %v532 = vmul.f32 %v517, %v528
        %s533 = scalar_lea.vmem %s1, 6
        %v534 = vld [vmem:[%s533] sm:$0x1]
        %536 = vset.pattern.permute.xlu0 0
        %537 = vperm.xlu0 %536, %v534
        %v538 = vpop.permute.xlu0 %537
        %v540 = vlaneseq
        %v541 = vshrl.u32 %v540, 7
        %v542 = vsub.s32 0, %v541
        %v543 = vrot.slane %v538, %v542
        %v544 = vmul.f32 %v543, %v531
        %v545 = vmul.f32 %v543, %v532
        %v546 = vadd.f32 %v509, %v544
        %v547 = vadd.f32 %v510, %v545
        %548 = vrot.lane.b32.xlu0 %v282, 112
        %v549 = vpop.permute.xlu0 %548
        %550 = vrot.lane.b32.xlu0 %v286, 112
        %v551 = vpop.permute.xlu0 %550
        %vm552 = vcmp.lt.s32.totalorder %v294, 112
        %v553 = vsel %vm552, %v549, %v551
        %v554 = vsel %vm552, %v551, %v549
        %s555 = scalar_lea.vmem %s0, 14
        %v556 = vld [vmem:[%s555] sm:$0x3]
        %v558 = vlaneseq
        %v559 = vshrl.u32 %v558, 7
        %v560 = vsub.s32 0, %v559
        %v561 = vrot.slane %v556, %v560
        %v562 = vlaneseq
        %v563 = vshrl.u32 %v562, 7
        %v564 = vsub.s32 1, %v563
        %v565 = vrot.slane %v556, %v564
        %v568 = vmul.f32 %v553, %v561
        %v569 = vmul.f32 %v554, %v565
        %s570 = scalar_lea.vmem %s1, 7
        %v571 = vld [vmem:[%s570] sm:$0x1]
        %573 = vset.pattern.permute.xlu0 0
        %574 = vperm.xlu0 %573, %v571
        %v575 = vpop.permute.xlu0 %574
        %v577 = vlaneseq
        %v578 = vshrl.u32 %v577, 7
        %v579 = vsub.s32 0, %v578
        %v580 = vrot.slane %v575, %v579
        %v581 = vmul.f32 %v580, %v568
        %v582 = vmul.f32 %v580, %v569
        %v583 = vadd.f32 %v546, %v581
        %v584 = vadd.f32 %v547, %v582
        %585 = vrot.lane.b32.xlu0 %v282, 111
        %v586 = vpop.permute.xlu0 %585
        %587 = vrot.lane.b32.xlu0 %v286, 111
        %v588 = vpop.permute.xlu0 %587
        %vm589 = vcmp.lt.s32.totalorder %v294, 111
        %v590 = vsel %vm589, %v586, %v588
        %v591 = vsel %vm589, %v588, %v586
        %s592 = scalar_lea.vmem %s0, 16
        %v593 = vld [vmem:[%s592] sm:$0x3]
        %v595 = vlaneseq
        %v596 = vshrl.u32 %v595, 7
        %v597 = vsub.s32 0, %v596
        %v598 = vrot.slane %v593, %v597
        %v599 = vlaneseq
        %v600 = vshrl.u32 %v599, 7
        %v601 = vsub.s32 1, %v600
        %v602 = vrot.slane %v593, %v601
        %v605 = vmul.f32 %v590, %v598
        %v606 = vmul.f32 %v591, %v602
        %s607 = scalar_lea.vmem %s1, 8
        %v608 = vld [vmem:[%s607] sm:$0x1]
        %610 = vset.pattern.permute.xlu0 0
        %611 = vperm.xlu0 %610, %v608
        %v612 = vpop.permute.xlu0 %611
        %v614 = vlaneseq
        %v615 = vshrl.u32 %v614, 7
        %v616 = vsub.s32 0, %v615
        %v617 = vrot.slane %v612, %v616
        %v618 = vmul.f32 %v617, %v605
        %v619 = vmul.f32 %v617, %v606
        %v620 = vadd.f32 %v583, %v618
        %v621 = vadd.f32 %v584, %v619
        %v622 = vld [vmem:[%s2] sm:$0xff]
        %624 = vset.pattern.permute.xlu0 0
        %625 = vperm.xlu0 %624, %v622
        %v626 = vpop.permute.xlu0 %625
        %v628 = vlaneseq
        %v629 = vshrl.u32 %v628, 7
        %v630 = vsub.s32 0, %v629
        %v631 = vrot.slane %v620, %v630
        %v632 = vlaneseq
        %v633 = vshrl.u32 %v632, 7
        %v634 = vsub.s32 0, %v633
        %v635 = vrot.slane %v621, %v634
        %v636 = vmul.f32 %v626, %v631
        %v637 = vmul.f32 %v626, %v635
        %v638 = vld [vmem:[%s3] sm:$0xff]
        %v639 = vcombine.high %v277, %v277
        %v640 = vrot.slane %v277, 1
        %v641 = vrot.slane %v639, 1
        %vm642 = vcmask 23552
        %v644 = vsel %vm642, %v638, 0
        %vm646 = vcmask 1042432
        %v647 = vsel %vm646, %v640, 0
        %v649 = vsel %vm646, %v641, 0
        %651 = vmatprep.subr.mxu0 0.0
        %652 = vmatpush1.msra.mxu0 0.0
        %653 = vmatprep.subr.mxu0 0.0
        %654 = vmatpush1.msra.mxu0 0.0
        %655 = vmatprep.subr.mxu0 0.0
        %656 = vmatpush1.msra.mxu0 0.0
        %657 = vmatprep.subr.mxu0 0.0
        %658 = vmatpush1.msra.mxu0 0.0
        %659 = vmatprep.subr.mxu0 0.0
        %660 = vmatpush1.msra.mxu0 0.0
        %661 = vmatprep.subr.mxu0 0.0
        %662 = vmatpush1.msra.mxu0 0.0
        %663 = vmatprep.subr.mxu0 0.0
        %664 = vmatpush1.msra.mxu0 0.0
        %665 = vmatprep.subr.mxu0 0.0
        %666 = vmatpush1.msra.mxu0 0.0
        %667 = vmatprep.subr.mxu0 0.0
        %668 = vmatpush1.msra.mxu0 0.0
        %669 = vmatprep.subr.mxu0 0.0
        %670 = vmatpush1.msra.mxu0 0.0
        %671 = vmatprep.subr.mxu0 0.0
        %672 = vmatpush1.msra.mxu0 0.0
        %673 = vmatprep.subr.mxu0 0.0
        %674 = vmatpush1.msra.mxu0 0.0
        %675 = vmatprep.subr.mxu0 0.0
        %676 = vmatpush1.msra.mxu0 0.0
        %677 = vmatprep.subr.mxu0 0.0
        %678 = vmatpush1.msra.mxu0 0.0
        %679 = vmatprep.subr.mxu0 0.0
        %680 = vmatpush1.msra.mxu0 0.0
        %681 = vmatprep.subr.mxu0 %v649
        %682 = vmatpush1.msra.mxu0 %v647
        %683 = vmatprep.subr.mxu0 0.0
        %684 = vmatpush2.msra.mxu0 0.0
        %685 = vmatprep.subr.mxu0 0.0
        %686 = vmatpush2.msra.mxu0 0.0
        %687 = vmatprep.subr.mxu0 0.0
        %688 = vmatpush2.msra.mxu0 0.0
        %689 = vmatprep.subr.mxu0 0.0
        %690 = vmatpush2.msra.mxu0 0.0
        %691 = vmatprep.subr.mxu0 0.0
        %692 = vmatpush2.msra.mxu0 0.0
        %693 = vmatprep.subr.mxu0 0.0
        %694 = vmatpush2.msra.mxu0 0.0
        %695 = vmatprep.subr.mxu0 0.0
        %696 = vmatpush2.msra.mxu0 0.0
        %697 = vmatprep.subr.mxu0 0.0
        %698 = vmatpush2.msra.mxu0 0.0
        %699 = vmatprep.subr.mxu0 0.0
        %700 = vmatpush2.msra.mxu0 0.0
        %701 = vmatprep.subr.mxu0 0.0
        %702 = vmatpush2.msra.mxu0 0.0
        %703 = vmatprep.subr.mxu0 0.0
        %704 = vmatpush2.msra.mxu0 0.0
        %705 = vmatprep.subr.mxu0 0.0
        %706 = vmatpush2.msra.mxu0 0.0
        %707 = vmatprep.subr.mxu0 0.0
        %708 = vmatpush2.msra.mxu0 0.0
        %709 = vmatprep.subr.mxu0 0.0
        %710 = vmatpush2.msra.mxu0 0.0
        %711 = vmatprep.subr.mxu0 0.0
        %712 = vmatpush2.msra.mxu0 0.0
        %713 = vmatprep.subr.mxu0 0.0
        %714 = vmatpush2.msra.mxu0 0.0
        %715 = vmatprep.mubr.f32.mxu0 0.0
        %716 = vmatmul.mubr.f32.gmra.mxu0 %v644
        %v717 = vpop.f32.mrf.mxu0
        %v718 = vadd.f32 0.0, %v717
        %v719 = vpop.f32.mrf.mxu0
        %v720 = vadd.f32 0.0, %v719
        %721 = vdwg.mxu0
        %v722 = vadd.f32 %v636, %v718
        %v723 = vadd.f32 %v637, %v720
        %v724 = vld [vmem:[%s4] sm:$0xff]
        %726 = vset.pattern.permute.xlu0 0
        %727 = vperm.xlu0 %726, %v724
        %v728 = vpop.permute.xlu0 %727
        %v730 = vadd.f32 %v722, %v728
        %v731 = vadd.f32 %v723, %v728
        %v732 = vmax.f32 %v730, 0.0
        %v733 = vmax.f32 %v731, 0.0
        %v734 = vld [vmem:[%s5] sm:$0xf]
        %vm735 = vcmask 64512
        %v737 = vsel %vm735, %v734, 0
        %739 = vmatprep.subr.mxu0 0.0
        %740 = vmatpush1.msra.mxu0 0.0
        %741 = vmatprep.subr.mxu0 0.0
        %742 = vmatpush1.msra.mxu0 0.0
        %743 = vmatprep.subr.mxu0 0.0
        %744 = vmatpush1.msra.mxu0 0.0
        %745 = vmatprep.subr.mxu0 0.0
        %746 = vmatpush1.msra.mxu0 0.0
        %747 = vmatprep.subr.mxu0 0.0
        %748 = vmatpush1.msra.mxu0 0.0
        %749 = vmatprep.subr.mxu0 0.0
        %750 = vmatpush1.msra.mxu0 0.0
        %751 = vmatprep.subr.mxu0 0.0
        %752 = vmatpush1.msra.mxu0 0.0
        %753 = vmatprep.subr.mxu0 0.0
        %754 = vmatpush1.msra.mxu0 0.0
        %755 = vmatprep.subr.mxu0 0.0
        %756 = vmatpush1.msra.mxu0 0.0
        %757 = vmatprep.subr.mxu0 0.0
        %758 = vmatpush1.msra.mxu0 0.0
        %759 = vmatprep.subr.mxu0 0.0
        %760 = vmatpush1.msra.mxu0 0.0
        %761 = vmatprep.subr.mxu0 0.0
        %762 = vmatpush1.msra.mxu0 0.0
        %763 = vmatprep.subr.mxu0 0.0
        %764 = vmatpush1.msra.mxu0 0.0
        %765 = vmatprep.subr.mxu0 0.0
        %766 = vmatpush1.msra.mxu0 0.0
        %767 = vmatprep.subr.mxu0 0.0
        %768 = vmatpush1.msra.mxu0 0.0
        %769 = vmatprep.subr.mxu0 %v733
        %770 = vmatpush1.msra.mxu0 %v732
        %771 = vmatprep.subr.mxu0 0.0
        %772 = vmatpush2.msra.mxu0 0.0
        %773 = vmatprep.subr.mxu0 0.0
        %774 = vmatpush2.msra.mxu0 0.0
        %775 = vmatprep.subr.mxu0 0.0
        %776 = vmatpush2.msra.mxu0 0.0
        %777 = vmatprep.subr.mxu0 0.0
        %778 = vmatpush2.msra.mxu0 0.0
        %779 = vmatprep.subr.mxu0 0.0
        %780 = vmatpush2.msra.mxu0 0.0
        %781 = vmatprep.subr.mxu0 0.0
        %782 = vmatpush2.msra.mxu0 0.0
        %783 = vmatprep.subr.mxu0 0.0
        %784 = vmatpush2.msra.mxu0 0.0
        %785 = vmatprep.subr.mxu0 0.0
        %786 = vmatpush2.msra.mxu0 0.0
        %787 = vmatprep.subr.mxu0 0.0
        %788 = vmatpush2.msra.mxu0 0.0
        %789 = vmatprep.subr.mxu0 0.0
        %790 = vmatpush2.msra.mxu0 0.0
        %791 = vmatprep.subr.mxu0 0.0
        %792 = vmatpush2.msra.mxu0 0.0
        %793 = vmatprep.subr.mxu0 0.0
        %794 = vmatpush2.msra.mxu0 0.0
        %795 = vmatprep.subr.mxu0 0.0
        %796 = vmatpush2.msra.mxu0 0.0
        %797 = vmatprep.subr.mxu0 0.0
        %798 = vmatpush2.msra.mxu0 0.0
        %799 = vmatprep.subr.mxu0 0.0
        %800 = vmatpush2.msra.mxu0 0.0
        %801 = vmatprep.subr.mxu0 0.0
        %802 = vmatpush2.msra.mxu0 0.0
        %803 = vmatprep.mubr.f32.mxu0 0.0
        %804 = vmatmul.mubr.f32.gmra.mxu0 %v737
        %v805 = vpop.f32.mrf.mxu0
        %v806 = vadd.f32 0.0, %v805
        %v807 = vpop.f32.mrf.mxu0
        %v808 = vadd.f32 0.0, %v807
        %809 = vdwg.mxu0
        %v812 = vcombine.low %v806, %v808
        %v814 = vadd.f32 %v277, %v812
        %815 = vst [vmem:[%s271] sm:$0xff] %v814
        %s816 = sand.u32 %s181, 1
        %s817 = scalar_lea.sflag [#allocation3], %s816
        %s818 = sand.u32 %s181, 1
        %s819 = smul.addr %s818, 8
        %s820 = scalar_lea.vmem [#allocation2], %s819
        // Predicated region
        $region49: #{tpu_custom_call.1} parent=47 // pred_check
          %p821 = pneg %p191
        $region50: #{tpu_custom_call.1} parent=47 // pred_check_branch
          %823 = sbr.rel (%p821) target = $region52
        $region51: #{tpu_custom_call.1} parent=47 // pred_region
          %s825 = ssub.s32 128, 128
          %826 = vsyncadd %s817, %s825
          %s827 = smul.addr %s21, 2
          %s828 = smul.addr %s827, 64
          %s829 = scalar_lea.hbm %s7, %s828
          %s831 = sshll.u32 %s820, 4
          %s832 = int_to_ptr.vmem [resolvable:$true] %s831
          %834 = dma.vmem_to_hbm [thread:$0]  %s832, 128, %s829, %s817
        $region52: #{tpu_custom_call.1} parent=47 // pred_fallthru
          _
      $region48: #{tpu_custom_call.1} parent=5 // pred_fallthru
        _
      %p835 = scmp.le.s32.totalorder 2, %s16
      // Predicated region
      $region53: #{tpu_custom_call.1} parent=5 // pred_check
        %p836 = pneg %p835
      $region54: #{tpu_custom_call.1} parent=5 // pred_check_branch
        %838 = sbr.rel (%p836) target = $region56
      $region55: #{tpu_custom_call.1} parent=5 // pred_region
        %s839 = ssub.s32 %s16, 2
        // Predicated region
        $region57: #{tpu_custom_call.1} parent=55 // pred_check
          %p840 = pneg %p197
        $region58: #{tpu_custom_call.1} parent=55 // pred_check_branch
          %842 = sbr.rel (%p840) target = $region60
        $region59: #{tpu_custom_call.1} parent=55 // pred_region
          %s843 = sand.u32 %s182, 1
          %s844 = scalar_lea.sflag [#allocation3], %s843
          %s845 = sand.u32 %s182, 1
          %s846 = smul.addr %s845, 8
          %s847 = scalar_lea.vmem [#allocation2], %s846
          %848 = dma.done %s844, 128
        $region60: #{tpu_custom_call.1} parent=55 // pred_fallthru
          _
      $region56: #{tpu_custom_call.1} parent=5 // pred_fallthru
        _
    $region6: #{tpu_custom_call.1} parent=1 // loop_footer
      %s20 = sadd.s32 1, %s16
    $region7: #{tpu_custom_call.1} parent=1 // loop_footer_branch
      %15 = sbr.rel target = $region3
    $region8: #{tpu_custom_call.1} parent=1 // loop_exit
      _
    %849 = vsyncpa [#allocation3], 1
    %s850 = scalar_lea.sflag [#allocation3], 1
    %851 = vsyncpa %s850, 1

</llo_original>
